<compile_context>
chip_gen: v5e
topology: v5e:2x2
jax: 0.10.0
libtpu: 0.0.40
codegen_flags: <defaults>
</compile_context>

<pallas_src>
import jax
import jax.numpy as jnp
from jax.experimental import pallas as pl
from jax.experimental.pallas import tpu as pltpu

LANES = 128
SUBLANES = 8
DEFAULT_TILE_ROWS = 2048   # (2048,128) f32 = 1 MiB/buffer; 2 in x 2 bufs + 1 MiB acc ~ 5 MiB VMEM
NUM_CORES = 2              # parallel chunks (megacore split on v7x; serial elsewhere)


def smooth_l1_loss(disp, target, *, max_tile_rows=DEFAULT_TILE_ROWS):
    assert disp.shape == target.shape, "disp/target must have the same shape"
    assert max_tile_rows % SUBLANES == 0
    n = disp.size
    assert n > 0

    d_flat = jnp.ravel(disp)     # keep source dtype; upcast happens in-kernel
    t_flat = jnp.ravel(target)

    # Align the flat length to whole (8, 128) sublane tiles. The copy only
    # happens when n is not a multiple of 1024; padded zeros give zero loss.
    pad = (-n) % (SUBLANES * LANES)
    if pad:
        d_flat = jnp.pad(d_flat, (0, pad))
        t_flat = jnp.pad(t_flat, (0, pad))

    rows = (n + pad) // LANES                         # multiple of 8
    tile_rows = min(max_tile_rows, rows)              # multiple of 8
    total_tiles = (rows + tile_rows - 1) // tile_rows
    num_chunks = NUM_CORES if total_tiles >= NUM_CORES else 1
    tiles_per_chunk = (total_tiles + num_chunks - 1) // num_chunks
    # Mask only when some block rows fall outside the real data
    # (partial edge tile, or clamped duplicate tiles in the last chunk).
    needs_mask = (rows % tile_rows != 0) or (tiles_per_chunk * num_chunks != total_tiles)

    d2 = d_flat.reshape(rows, LANES)
    t2 = t_flat.reshape(rows, LANES)

    def in_index(c, i):
        t = c * tiles_per_chunk + i
        return (jnp.minimum(t, total_tiles - 1), 0)   # clamp keeps the DMA in bounds

    def kernel(d_ref, t_ref, out_ref, acc_ref):
        # Per-element f32 accumulator lives in VMEM scratch; zero at chunk start.
        @pl.when(pl.program_id(1) == 0)
        def _():
            acc_ref[...] = jnp.zeros_like(acc_ref)

        diff = d_ref[...].astype(jnp.float32) - t_ref[...].astype(jnp.float32)
        adiff = jnp.abs(diff)
        # smooth_l1 with beta=1 (PyTorch default): 0.5*d^2 if |d|<1 else |d|-0.5
        elem = jnp.where(adiff < 1.0, 0.5 * diff * diff, adiff - 0.5)

        if needs_mask:
            row0 = (pl.program_id(0) * tiles_per_chunk + pl.program_id(1)) * tile_rows
            ridx = row0 + jax.lax.broadcasted_iota(jnp.int32, (tile_rows, LANES), 0)
            elem = jnp.where(ridx < rows, elem, 0.0)

        acc_ref[...] += elem

        # Finalize once per chunk: fold (tile_rows, 128) -> (8, 128) so the
        # HBM writeback and the wrapper-side reduce stay tiny.
        @pl.when(pl.program_id(1) == pl.num_programs(1) - 1)
        def _():
            nblk = tile_rows // SUBLANES

            def fold(i, acc8):
                off = pl.multiple_of(i * SUBLANES, SUBLANES)
                return acc8 + acc_ref[pl.ds(off, SUBLANES), :]

            out_ref[...] = jax.lax.fori_loop(
                0, nblk, fold, jnp.zeros((SUBLANES, LANES), jnp.float32))

    partials = pl.pallas_call(
        kernel,
        out_shape=jax.ShapeDtypeStruct((num_chunks * SUBLANES, LANES), jnp.float32),
        grid_spec=pltpu.PrefetchScalarGridSpec(
            num_scalar_prefetch=0,
            grid=(num_chunks, tiles_per_chunk),
            in_specs=[
                pl.BlockSpec((tile_rows, LANES), in_index),
                pl.BlockSpec((tile_rows, LANES), in_index),
            ],
            out_specs=pl.BlockSpec((SUBLANES, LANES), lambda c, i: (c, 0)),
            scratch_shapes=[pltpu.VMEM((tile_rows, LANES), jnp.float32)],
        ),
        compiler_params=pltpu.CompilerParams(
            dimension_semantics=("parallel", "arbitrary"),
        ),
    )(d2, t2)

    # Tiny finalize (num_chunks * 8 * 128 f32) handled by XLA.
    return (jnp.sum(partials) / jnp.float32(n)).astype(jnp.float32)


def _reference(disp, target):
    diff = disp.astype(jnp.float32) - target.astype(jnp.float32)
    ad = jnp.abs(diff)
    return jnp.mean(jnp.where(ad < 1.0, 0.5 * diff * diff, ad - 0.5))


if __name__ == "__main__":
    key = jax.random.PRNGKey(0)

    # (shape, max_tile_rows override) — small shapes chosen to exercise:
    #   * single-tile fast path (no masking)
    #   * chunk split + partial edge-tile masking
    #   * clamped duplicate tile in the last chunk
    #   * default tile size with a partial edge tile
    test_cases = [
        ((2, 1, 16, 16), DEFAULT_TILE_ROWS),
        ((2, 4, 18, 16), 16),
        ((2, 4, 24, 16), 8),
        ((2, 8, 160, 128), DEFAULT_TILE_ROWS),
    ]

    for shape, tile_rows in test_cases:
        key, k1, k2 = jax.random.split(key, 3)
        disp = jax.random.normal(k1, shape, dtype=jnp.float32) * 2.0
        target = jax.random.normal(k2, shape, dtype=jnp.float32) * 2.0

        loss = smooth_l1_loss(disp, target, max_tile_rows=tile_rows)
        jax.block_until_ready(loss)

        ref = _reference(disp, target)
        assert jnp.allclose(loss, ref, rtol=1e-4, atol=1e-6), (shape, loss, ref)

    print("KERNEL_OK")
</pallas_src>

<mosaic_0001>
module attributes {stable_mosaic.version = 11 : i64} {
  func.func @kernel(%arg0: i32, %arg1: i32, %arg2: memref<8x128xf32, #tpu.memory_space<vmem>>, %arg3: memref<8x128xf32, #tpu.memory_space<vmem>>, %arg4: memref<8x128xf32, #tpu.memory_space<vmem>>, %arg5: memref<8x128xf32, #tpu.memory_space<vmem>>) attributes {dimension_semantics = [#tpu.dimension_semantics<parallel>, #tpu.dimension_semantics<arbitrary>], iteration_bounds = array<i64: 1, 1>, scalar_prefetch = 0 : i64, scratch_operands = 1 : i64, tpu.core_type = #tpu.core_type<tc>, window_params = [{transform_indices = @transform_0, window_bounds = array<i64: 8, 128>}, {transform_indices = @transform_1, window_bounds = array<i64: 8, 128>}, {transform_indices = @transform_2, window_bounds = array<i64: 8, 128>}]} {
    %c0_i32 = arith.constant 0 : i32
    %0 = arith.cmpi eq, %arg1, %c0_i32 : i32
    %1 = arith.extui %0 : i1 to i32
    %c0_i32_0 = arith.constant 0 : i32
    %2 = arith.cmpi ne, %1, %c0_i32_0 : i32
    scf.if %2 {
      %cst_12 = arith.constant 0.000000e+00 : f32
      %21 = vector.broadcast %cst_12 : f32 to vector<8x128xf32>
      %c0_13 = arith.constant 0 : index
      %c0_14 = arith.constant 0 : index
      %22 = vector.load %arg5[%c0_13, %c0_14] : memref<8x128xf32, #tpu.memory_space<vmem>>, vector<8x128xf32>
      tpu.vector_store %arg5[%c0_13, %c0_14], %21 {strides = array<i32>} : memref<8x128xf32, #tpu.memory_space<vmem>>, vector<8x128xf32>,
    } else {
    }
    %c0 = arith.constant 0 : index
    %c0_1 = arith.constant 0 : index
    %3 = vector.load %arg2[%c0, %c0_1] : memref<8x128xf32, #tpu.memory_space<vmem>>, vector<8x128xf32>
    %c0_2 = arith.constant 0 : index
    %c0_3 = arith.constant 0 : index
    %4 = vector.load %arg3[%c0_2, %c0_3] : memref<8x128xf32, #tpu.memory_space<vmem>>, vector<8x128xf32>
    %5 = arith.subf %3, %4 : vector<8x128xf32>
    %6 = math.absf %5 : vector<8x128xf32>
    %cst = arith.constant 1.000000e+00 : f32
    %7 = vector.broadcast %cst : f32 to vector<8x128xf32>
    %8 = arith.cmpf olt, %6, %7 : vector<8x128xf32>
    %cst_4 = arith.constant 5.000000e-01 : f32
    %9 = vector.broadcast %cst_4 : f32 to vector<8x128xf32>
    %10 = arith.mulf %9, %5 : vector<8x128xf32>
    %11 = arith.mulf %10, %5 : vector<8x128xf32>
    %cst_5 = arith.constant 5.000000e-01 : f32
    %12 = vector.broadcast %cst_5 : f32 to vector<8x128xf32>
    %13 = arith.subf %6, %12 : vector<8x128xf32>
    %14 = arith.select %8, %11, %13 : vector<8x128xi1>, vector<8x128xf32>
    %c0_6 = arith.constant 0 : index
    %c0_7 = arith.constant 0 : index
    %15 = vector.load %arg5[%c0_6, %c0_7] : memref<8x128xf32, #tpu.memory_space<vmem>>, vector<8x128xf32>
    %16 = arith.addf %15, %14 : vector<8x128xf32>
    %c0_8 = arith.constant 0 : index
    %c0_9 = arith.constant 0 : index
    %17 = vector.load %arg5[%c0_8, %c0_9] : memref<8x128xf32, #tpu.memory_space<vmem>>, vector<8x128xf32>
    tpu.vector_store %arg5[%c0_8, %c0_9], %16 {strides = array<i32>} : memref<8x128xf32, #tpu.memory_space<vmem>>, vector<8x128xf32>,
    %c0_i32_10 = arith.constant 0 : i32
    %18 = arith.cmpi eq, %arg1, %c0_i32_10 : i32
    %19 = arith.extui %18 : i1 to i32
    %c0_i32_11 = arith.constant 0 : i32
    %20 = arith.cmpi ne, %19, %c0_i32_11 : i32
    scf.if %20 {
      %cst_12 = arith.constant 0.000000e+00 : f32
      %21 = vector.broadcast %cst_12 : f32 to vector<8x128xf32>
      %c0_i32_13 = arith.constant 0 : i32
      %c8_i32 = arith.constant 8 : i32
      %22 = arith.muli %c0_i32_13, %c8_i32 : i32
      %23 = tpu.assume_multiple %22, 8 : i32
      %24 = arith.index_cast %23 : i32 to index
      %c0_14 = arith.constant 0 : index
      %25 = vector.load %arg5[%24, %c0_14] : memref<8x128xf32, #tpu.memory_space<vmem>>, vector<8x128xf32>
      %26 = arith.addf %21, %25 : vector<8x128xf32>
      %c1_i32 = arith.constant 1 : i32
      %c0_15 = arith.constant 0 : index
      %c0_16 = arith.constant 0 : index
      %27 = vector.load %arg4[%c0_15, %c0_16] : memref<8x128xf32, #tpu.memory_space<vmem>>, vector<8x128xf32>
      tpu.vector_store %arg4[%c0_15, %c0_16], %26 {strides = array<i32>} : memref<8x128xf32, #tpu.memory_space<vmem>>, vector<8x128xf32>,
    } else {
    }
    return
  }
  func.func @transform_0(%arg0: i32, %arg1: i32) -> (i32, i32) {
    %c1_i32 = arith.constant 1 : i32
    %0 = arith.muli %arg0, %c1_i32 : i32
    %1 = arith.addi %0, %arg1 : i32
    %c0_i32 = arith.constant 0 : i32
    %2 = arith.minsi %1, %c0_i32 : i32
    %c0_i32_0 = arith.constant 0 : i32
    %c0_i32_1 = arith.constant 0 : i32
    return %2, %c0_i32_0 : i32, i32
  }
  func.func @transform_1(%arg0: i32, %arg1: i32) -> (i32, i32) {
    %c1_i32 = arith.constant 1 : i32
    %0 = arith.muli %arg0, %c1_i32 : i32
    %1 = arith.addi %0, %arg1 : i32
    %c0_i32 = arith.constant 0 : i32
    %2 = arith.minsi %1, %c0_i32 : i32
    %c0_i32_0 = arith.constant 0 : i32
    %c0_i32_1 = arith.constant 0 : i32
    return %2, %c0_i32_0 : i32, i32
  }
  func.func @transform_2(%arg0: i32, %arg1: i32) -> (i32, i32) {
    %c0_i32 = arith.constant 0 : i32
    %c0_i32_0 = arith.constant 0 : i32
    return %arg0, %c0_i32 : i32, i32
  }
}

</mosaic_0001>

<llo_original>
// kernel: tpu_custom_call.1
$region0: #{tpu_custom_call.1}
  #allocation0 [shape = 'u32[]', space=smem, size = 0x4, offset = 0x4, fixed_abs, tag = 'smem constant byte address 0x4 - core index']
  #allocation1 [shape = 'u32[72,128]{1,0:T(1,128)}', space=vmem, size = 0x9000, scoped, tag = 'internal scratch']
  #allocation2 [shape = 'f32[8,128]{1,0:T(8,128)}', space=vmem, size = 0x1000, scoped, tag = 'scratch operand']
  %s0 = inlined_call_operand.hbm [shape: f32[8,128], index: 0, kind: input, shape index: {}]
  %s1 = inlined_call_operand.hbm [shape: f32[8,128], index: 1, kind: input, shape index: {}]
  %s2 = inlined_call_operand.hbm [shape: f32[8,128], index: 2, kind: output, shape index: {}]
  %s3 = sld [smem:[#allocation0]]
  $region34: #{tpu_custom_call.1} parent=0
    _
  %s5 = ssub.s32 1, %s3
  %s6 = scalar_select 0, %s5, %s3
  $region1: #{tpu_custom_call.1} parent=0
    #allocation3 [shape = 'u8[4096]{0}', space=vmem, size = 0x1000, scoped, tag = 'input window, operand 0, single buffered']
    #allocation4 [shape = 's32[1]{0}', space=sflag, size = 0x4, scoped, tag = 'scoped memory for tpu_custom_call.1']
    #allocation5 [shape = 's32[1]{0}', space=sflag, size = 0x4, scoped, tag = 'scoped memory for tpu_custom_call.1']
    #allocation6 [shape = 'u8[4096]{0}', space=vmem, size = 0x1000, scoped, tag = 'input window, operand 1, single buffered']
    #allocation7 [shape = 's32[1]{0}', space=sflag, size = 0x4, scoped, tag = 'scoped memory for tpu_custom_call.1']
    #allocation8 [shape = 'u8[4096]{0}', space=vmem, size = 0x1000, scoped, tag = 'output window, operand 0, single buffered']
    %7 = vsyncpa [#allocation4], 0
    %8 = vsyncpa [#allocation7], 0
    %9 = vsyncpa [#allocation5], 0
    // Predicated region
    $region2: #{tpu_custom_call.1} parent=1 // pred_check
      _
    $region3: #{tpu_custom_call.1} parent=1 // pred_check_branch
      %11 = sbr.rel (0) target = $region5
    $region4: #{tpu_custom_call.1} parent=1 // pred_region
      %s12 = sadd.s32 0, 0
      %p13 = scmp.lt.s32.totalorder %s12, 0
      %s14 = scalar_select %p13, %s12, 0
      %16 = vsyncadd [#allocation4], 0
      %s17 = smul.addr %s14, 8
      %s18 = scalar_lea.hbm %s0, %s17
      %s20 = sshll.u32 %s18, 4
      %s21 = int_to_ptr.hbm [resolvable:$true] %s20
      %s22 = sshll.u32 [#allocation3], 4
      %s23 = int_to_ptr.vmem [resolvable:$true] %s22
      %25 = dma.hbm_to_vmem [thread:$0]  %s21, 128, %s23, [#allocation4]
    $region5: #{tpu_custom_call.1} parent=1 // pred_fallthru
      _
    // Predicated region
    $region6: #{tpu_custom_call.1} parent=1 // pred_check
      _
    $region7: #{tpu_custom_call.1} parent=1 // pred_check_branch
      %27 = sbr.rel (0) target = $region9
    $region8: #{tpu_custom_call.1} parent=1 // pred_region
      %s28 = sadd.s32 0, 0
      %p29 = scmp.lt.s32.totalorder %s28, 0
      %s30 = scalar_select %p29, %s28, 0
      %32 = vsyncadd [#allocation7], 0
      %s33 = smul.addr %s30, 8
      %s34 = scalar_lea.hbm %s1, %s33
      %s36 = sshll.u32 %s34, 4
      %s37 = int_to_ptr.hbm [resolvable:$true] %s36
      %s38 = sshll.u32 [#allocation6], 4
      %s39 = int_to_ptr.vmem [resolvable:$true] %s38
      %41 = dma.hbm_to_vmem [thread:$0]  %s37, 128, %s39, [#allocation7]
    $region9: #{tpu_custom_call.1} parent=1 // pred_fallthru
      _
    // Predicated region
    $region10: #{tpu_custom_call.1} parent=1 // pred_check
      _
    $region11: #{tpu_custom_call.1} parent=1 // pred_check_branch
      %43 = sbr.rel (0) target = $region13
    $region12: #{tpu_custom_call.1} parent=1 // pred_region
      %45 = dma.done [#allocation4], 128
    $region13: #{tpu_custom_call.1} parent=1 // pred_fallthru
      _
    // Predicated region
    $region14: #{tpu_custom_call.1} parent=1 // pred_check
      _
    $region15: #{tpu_custom_call.1} parent=1 // pred_check_branch
      %47 = sbr.rel (0) target = $region17
    $region16: #{tpu_custom_call.1} parent=1 // pred_region
      %49 = dma.done [#allocation7], 128
    $region17: #{tpu_custom_call.1} parent=1 // pred_fallthru
      _
    %s50 = sadd.s32 0, 0
    %p51 = scmp.lt.s32.totalorder %s50, 0
    %s52 = scalar_select %p51, %s50, 0
    %s53 = sadd.s32 0, 0
    %p54 = scmp.lt.s32.totalorder %s53, 0
    %s55 = scalar_select %p54, %s53, 0
    %p56 = scmp.eq.s32.totalorder 0, 0
    // Predicated region
    $region18: #{tpu_custom_call.1} parent=1 // pred_check
      %p57 = pneg %p56
    $region19: #{tpu_custom_call.1} parent=1 // pred_check_branch
      %59 = sbr.rel (%p57) target = $region21
    $region20: #{tpu_custom_call.1} parent=1 // pred_region
      %60 = vst [vmem:[#allocation2] sm:$0xff] 0.0
    $region21: #{tpu_custom_call.1} parent=1 // pred_fallthru
      _
    %v61 = vld [vmem:[#allocation3] sm:$0xff]
    %v62 = vld [vmem:[#allocation6] sm:$0xff]
    %v63 = vsub.f32 %v61, %v62
    %v64 = vand.u32 2147483647, %v63
    %vm65 = vcmp.lt.f32.partialorder %v64, 1.0
    %v66 = vmul.f32 %v63, 0.5
    %v67 = vmul.f32 %v66, %v63
    %v68 = vsub.f32 %v64, 0.5
    %v69 = vsel %vm65, %v67, %v68
    %v70 = vld [vmem:[#allocation2] sm:$0xff]
    %v71 = vadd.f32 %v70, %v69
    %72 = vst [vmem:[#allocation2] sm:$0xff] %v71
    // Predicated region
    $region22: #{tpu_custom_call.1} parent=1 // pred_check
      %p73 = pneg %p56
    $region23: #{tpu_custom_call.1} parent=1 // pred_check_branch
      %75 = sbr.rel (%p73) target = $region25
    $region24: #{tpu_custom_call.1} parent=1 // pred_region
      %v76 = vld [vmem:[#allocation2] sm:$0xff]
      %v77 = vadd.f32 %v76, 0.0
      %78 = vst [vmem:[#allocation8] sm:$0xff] %v77
    $region25: #{tpu_custom_call.1} parent=1 // pred_fallthru
      _
    // Predicated region
    $region26: #{tpu_custom_call.1} parent=1 // pred_check
      _
    $region27: #{tpu_custom_call.1} parent=1 // pred_check_branch
      %80 = sbr.rel (0) target = $region29
    $region28: #{tpu_custom_call.1} parent=1 // pred_region
      %82 = vsyncadd [#allocation5], 0
      %s84 = sshll.u32 [#allocation8], 4
      %s85 = int_to_ptr.vmem [resolvable:$true] %s84
      %s86 = sshll.u32 %s2, 4
      %s87 = int_to_ptr.hbm [resolvable:$true] %s86
      %89 = dma.vmem_to_hbm [thread:$0]  %s85, 128, %s87, [#allocation5]
    $region29: #{tpu_custom_call.1} parent=1 // pred_fallthru
      _
    // Predicated region
    $region30: #{tpu_custom_call.1} parent=1 // pred_check
      _
    $region31: #{tpu_custom_call.1} parent=1 // pred_check_branch
      %91 = sbr.rel (0) target = $region33
    $region32: #{tpu_custom_call.1} parent=1 // pred_region
      %93 = dma.done [#allocation5], 128
    $region33: #{tpu_custom_call.1} parent=1 // pred_fallthru
      _
    %94 = vsyncpa [#allocation4], 1
    %95 = vsyncpa [#allocation7], 1
    %96 = vsyncpa [#allocation5], 1

</llo_original>
